<compile_context>
chip_gen: v5e
topology: v5e:2x2
jax: 0.10.0
libtpu: 0.0.40
codegen_flags: <defaults>
</compile_context>

<pallas_src>
import functools
import math

import jax
import jax.numpy as jnp
from jax.experimental import pallas as pl
from jax.experimental.pallas import tpu as pltpu


# ---------------------------------------------------------------------------
# Helpers
# ---------------------------------------------------------------------------

def _spec(shape, index_map, buffers=None):
    """BlockSpec with an optional pipeline buffer-count override (VMEM footprint).

    Falls back to a plain BlockSpec if this JAX build does not accept
    `pipeline_mode=` (the override is a footprint optimization only).
    """
    if buffers is not None:
        try:
            return pl.BlockSpec(shape, index_map, pipeline_mode=pl.Buffered(buffers))
        except Exception:
            pass
    return pl.BlockSpec(shape, index_map)


def _pick_tile(s):
    """Largest MXU/lane-friendly tile that divides s (falls back to full length)."""
    for t in (256, 128):
        if s >= t and s % t == 0:
            return t
    return s


def _vmem_limit(entries, slack=4 << 20):
    """vmem_limit_bytes from actual block sizes, clamped to [32 MiB, 64 MiB]."""
    total = slack
    for shape, dtype, copies in entries:
        total += math.prod(shape) * jnp.dtype(dtype).itemsize * copies
    return int(min(max(total, 32 << 20), 64 << 20))


# ---------------------------------------------------------------------------
# Stage 1: linear projection kernel  (y = x @ W + b, bf16 MXU, f32 accumulate)
# ---------------------------------------------------------------------------

def _linear_kernel(x_ref, w_ref, b_ref, o_ref):
    y = jnp.dot(x_ref[0], w_ref[...], preferred_element_type=jnp.float32)
    o_ref[0] = (y + b_ref[...]).astype(o_ref.dtype)


def _project(x_bf16, w_bf16, b_f32, *, ts):
    B, S, Hin = x_bf16.shape
    Hout = w_bf16.shape[1]
    vmem = _vmem_limit([
        ((ts, Hin), jnp.bfloat16, 2),       # x tile (double-buffered)
        ((Hin, Hout), jnp.bfloat16, 1),     # weight, resident / single-buffered
        ((1, Hout), jnp.float32, 2),
        ((ts, Hout), jnp.bfloat16, 2),      # output tile
        ((ts, Hout), jnp.float32, 2),       # f32 accumulation intermediate
    ])
    return pl.pallas_call(
        _linear_kernel,
        out_shape=jax.ShapeDtypeStruct((B, S, Hout), jnp.bfloat16),
        grid=(B, S // ts),
        in_specs=[
            pl.BlockSpec((1, ts, Hin), lambda b, s: (b, s, 0)),
            _spec((Hin, Hout), lambda b, s: (0, 0), buffers=1),   # resident weight
            _spec((1, Hout), lambda b, s: (0, 0), buffers=1),     # resident bias
        ],
        out_specs=pl.BlockSpec((1, ts, Hout), lambda b, s: (b, s, 0)),
        compiler_params=pltpu.CompilerParams(
            dimension_semantics=("parallel", "parallel"),
            vmem_limit_bytes=vmem,
        ),
    )(x_bf16, w_bf16, b_f32)


# ---------------------------------------------------------------------------
# Stage 2: attention + fused output projection
# ---------------------------------------------------------------------------

def _attn_kernel(*refs, n_head_blocks, heads_per_block, kv_resident, has_mask):
    if has_mask:
        mask_ref, q_ref, k_ref, v_ref, wo_ref, bo_ref, o_ref, acc_ref = refs
    else:
        q_ref, k_ref, v_ref, wo_ref, bo_ref, o_ref, acc_ref = refs
        mask_ref = None

    hi = pl.program_id(2)
    hb = heads_per_block

    @pl.when(hi == 0)
    def _():
        acc_ref[...] = jnp.zeros_like(acc_ref)

    q = q_ref[0]                                  # (hb, tq, dk)  bf16 (scale pre-folded)
    h0 = hi * hb
    wo = wo_ref[pl.ds(h0, hb)]                    # (hb, dk, H)   bf16, VMEM-resident
    if kv_resident:
        k = k_ref[0, pl.ds(h0, hb)]               # (hb, Skv, dk) bf16, VMEM-resident
        v = v_ref[0, pl.ds(h0, hb)]
    else:
        k = k_ref[0]                              # streamed per head-block
        v = v_ref[0]

    # Scores: batched contraction on d_k, no explicit K transpose.
    s = jnp.einsum("hqd,hkd->hqk", q, k,
                   preferred_element_type=jnp.float32)          # (hb, tq, Skv) f32

    if has_mask:
        # Precomputed additive bias: 0 where attend, -1e9 where masked.
        s = s + mask_ref[0, 0].astype(jnp.float32)[None]

    # Softmax in f32; reciprocal on the EUP slot (off the VALU).
    m = jnp.max(s, axis=-1, keepdims=True)
    e = jnp.exp(s - m)
    p = e * pl.reciprocal(jnp.sum(e, axis=-1, keepdims=True), approx=True)
    # TODO(synk): torch.nn.Dropout on the attention probabilities (train mode) is not
    # reproduced; this is eval-mode (identity) behavior.

    ctx = jnp.einsum("hqk,hkd->hqd", p.astype(jnp.bfloat16), v,
                     preferred_element_type=jnp.float32)        # (hb, tq, dk) f32

    # Fused output projection for this head block:
    #   concat_h(ctx_h) @ Wo == sum_h ctx_h @ Wo[h*dk:(h+1)*dk, :]
    # Accumulated locally -> single f32 scratch update per head block.
    contrib = jnp.dot(ctx[0].astype(jnp.bfloat16), wo[0],
                      preferred_element_type=jnp.float32)
    for i in range(1, hb):
        contrib = contrib + jnp.dot(ctx[i].astype(jnp.bfloat16), wo[i],
                                    preferred_element_type=jnp.float32)
    acc_ref[...] += contrib

    @pl.when(hi == n_head_blocks - 1)
    def _():
        o_ref[0] = (acc_ref[...] + bo_ref[...]).astype(o_ref.dtype)


# ---------------------------------------------------------------------------
# Public wrapper
# ---------------------------------------------------------------------------

def multi_head_attention(query, key, value, mask, params, num_heads, out_dtype=None):
    """query: (B, Sq, H), key/value: (B, Skv, H).  mask: None or 0/1 tensor
    broadcastable against scores, i.e. (B|1, 1, 1|Sq, Skv).  Weights are stored
    pre-transposed as [in, out] so y = x @ W + b (torch.nn.Linear semantics)."""
    B, Sq, H = query.shape
    _, Skv, _ = key.shape
    assert H % num_heads == 0
    dk = H // num_heads
    scale = 1.0 / math.sqrt(dk)
    bf16 = jnp.bfloat16
    out_dtype = out_dtype or query.dtype   # bf16 here would halve output writeback

    # ---- Stage 1: projections (weights resident, computed once per token) --------
    # 1/sqrt(d_k) folded into Wq/bq on the host (scales weights, not scores).
    wq = (params["wq"] * scale).astype(bf16)
    bq = (params["bq"] * scale).reshape(1, H).astype(jnp.float32)
    wk = params["wk"].astype(bf16)
    bk = params["bk"].reshape(1, H).astype(jnp.float32)
    wv = params["wv"].astype(bf16)
    bv = params["bv"].reshape(1, H).astype(jnp.float32)

    q = _project(query.astype(bf16), wq, bq, ts=_pick_tile(Sq))    # (B, Sq, H) bf16
    k = _project(key.astype(bf16), wk, bk, ts=_pick_tile(Skv))     # (B, Skv, H) bf16
    v = _project(value.astype(bf16), wv, bv, ts=_pick_tile(Skv))   # (B, Skv, H) bf16

    # Head-major layout for the attention kernel (plain XLA layout op, bf16).
    def to_heads(t, s):
        return t.reshape(B, s, num_heads, dk).transpose(0, 2, 1, 3)

    qh, kh, vh = to_heads(q, Sq), to_heads(k, Skv), to_heads(v, Skv)

    # ---- Stage 2: attention + fused output projection ----------------------------
    wo_h = params["wo"].reshape(num_heads, dk, H).astype(bf16)     # head-major rows
    bo = params["bo"].reshape(1, H).astype(jnp.float32)

    tq = _pick_tile(Sq)
    nq = Sq // tq
    # Head block: aim for hb*dk >= 128/256 so the output-projection work per step is
    # MXU-friendly, while keeping the (hb, tq, Skv) score tile modest.
    hb = max(1, min(num_heads, 8, max(1, 256 // dk)))
    while num_heads % hb:
        hb -= 1
    n_hblk = num_heads // hb

    # Keep whole-batch-item K/V resident in VMEM when they fit (<= ~8 MiB each);
    # otherwise stream them per head block.  (Flash-style KV tiling would remove the
    # Skv ceiling entirely; not needed at these sizes.)
    kv_bytes = num_heads * Skv * dk * 2
    kv_resident = kv_bytes <= (8 << 20)

    has_mask = mask is not None
    in_specs, operands = [], []
    mblk = 1
    if has_mask:
        mask = jnp.asarray(mask)
        if mask.ndim == 2:
            mask = mask[None, None]
        elif mask.ndim == 3:
            mask = mask[:, None]
        mb, mq_len = mask.shape[0], mask.shape[2]
        # Additive bias: 0 where attend, -1e9 where masked (bf16 -> 2x less mask DMA).
        mask_bias = ((mask.astype(jnp.float32) - 1.0) * 1e9).astype(bf16)
        mblk = tq if mq_len > 1 else 1

        def mask_map(b, qi, hi, _mb=mb, _mq=mq_len):
            return (b if _mb > 1 else 0, 0, qi if _mq > 1 else 0, 0)

        in_specs.append(pl.BlockSpec((1, 1, mblk, Skv), mask_map))
        operands.append(mask_bias)

    if kv_resident:
        kv_spec = _spec((1, num_heads, Skv, dk), lambda b, qi, hi: (b, 0, 0, 0),
                        buffers=1)           # resident per batch item, single buffer
    else:
        kv_spec = pl.BlockSpec((1, hb, Skv, dk), lambda b, qi, hi: (b, hi, 0, 0))

    in_specs += [
        pl.BlockSpec((1, hb, tq, dk), lambda b, qi, hi: (b, hi, qi, 0)),   # Q tile
        kv_spec,                                                           # K
        kv_spec,                                                           # V
        _spec((num_heads, dk, H), lambda b, qi, hi: (0, 0, 0), buffers=1),  # Wo resident
        _spec((1, H), lambda b, qi, hi: (0, 0), buffers=1),                 # bo resident
    ]
    operands += [qh, kh, vh, wo_h, bo]

    kv_copies = 2 * (1 if kv_resident else 2)
    kv_heads = num_heads if kv_resident else hb
    vmem = _vmem_limit([
        ((hb, tq, dk), bf16, 2),                      # Q tile
        ((kv_heads, Skv, dk), bf16, kv_copies),       # K + V
        ((num_heads, dk, H), bf16, 1),                # Wo
        ((tq, H), out_dtype, 2),                      # output tile
        ((tq, H), jnp.float32, 1),                    # accumulator scratch
        ((hb, tq, Skv), jnp.float32, 3),              # scores / exp / probs
        ((1, mblk, Skv), bf16, 2),                    # mask bias
    ])

    kernel = functools.partial(
        _attn_kernel,
        n_head_blocks=n_hblk, heads_per_block=hb,
        kv_resident=kv_resident, has_mask=has_mask,
    )

    return pl.pallas_call(
        kernel,
        out_shape=jax.ShapeDtypeStruct((B, Sq, H), out_dtype),
        grid=(B, nq, n_hblk),
        in_specs=in_specs,
        out_specs=pl.BlockSpec((1, tq, H), lambda b, qi, hi: (b, qi, 0)),
        scratch_shapes=[pltpu.VMEM((tq, H), jnp.float32)],
        compiler_params=pltpu.CompilerParams(
            dimension_semantics=("parallel", "parallel", "arbitrary"),
            vmem_limit_bytes=vmem,
        ),
    )(*operands)


# ---------------------------------------------------------------------------
# Pure-JAX reference (mirrors the PyTorch forward; dropout = identity)
# ---------------------------------------------------------------------------

def multi_head_attention_ref(query, key, value, mask, params, num_heads):
    B, Sq, H = query.shape
    dk = H // num_heads

    q = query @ params["wq"] + params["bq"]
    k = key @ params["wk"] + params["bk"]
    v = value @ params["wv"] + params["bv"]

    def heads(t):
        return t.reshape(B, -1, num_heads, dk).transpose(0, 2, 1, 3)

    qh, kh, vh = heads(q), heads(k), heads(v)
    scores = jnp.einsum("bhqd,bhkd->bhqk", qh, kh) / math.sqrt(dk)
    if mask is not None:
        scores = jnp.where(mask == 0, -1e9, scores)
    p = jax.nn.softmax(scores, axis=-1)
    ctx = jnp.einsum("bhqk,bhkd->bhqd", p, vh)
    merged = ctx.transpose(0, 2, 1, 3).reshape(B, Sq, H)
    return merged @ params["wo"] + params["bo"]


def init_params(key, hidden):
    ks = jax.random.split(key, 8)
    s = 0.05
    return {
        "wq": jax.random.normal(ks[0], (hidden, hidden), jnp.float32) * s,
        "wk": jax.random.normal(ks[1], (hidden, hidden), jnp.float32) * s,
        "wv": jax.random.normal(ks[2], (hidden, hidden), jnp.float32) * s,
        "wo": jax.random.normal(ks[3], (hidden, hidden), jnp.float32) * s,
        "bq": jax.random.normal(ks[4], (hidden,), jnp.float32) * s,
        "bk": jax.random.normal(ks[5], (hidden,), jnp.float32) * s,
        "bv": jax.random.normal(ks[6], (hidden,), jnp.float32) * s,
        "bo": jax.random.normal(ks[7], (hidden,), jnp.float32) * s,
    }


if __name__ == "__main__":
    B, S, H, NH = 2, 8, 32, 4
    key = jax.random.PRNGKey(0)
    kq, kk, kv, kp, km = jax.random.split(key, 5)

    q = jax.random.normal(kq, (B, S, H), jnp.float32)
    k = jax.random.normal(kk, (B, S, H), jnp.float32)
    v = jax.random.normal(kv, (B, S, H), jnp.float32)

    # key-vector mask: 1 = attend, 0 = masked; broadcast over heads and queries.
    mask = (jax.random.uniform(km, (B, 1, 1, S)) > 0.2).astype(jnp.float32)

    params = init_params(kp, H)

    out = jax.block_until_ready(multi_head_attention(q, k, v, mask, params, NH))
    out_nomask = jax.block_until_ready(multi_head_attention(q, k, v, None, params, NH))

    # Reference on bf16-rounded inputs/weights (the kernels run bf16 MXU inputs with
    # f32 accumulation), so the comparison isolates kernel correctness.
    rt = lambda t: t.astype(jnp.bfloat16).astype(jnp.float32)
    params_r = {n: (rt(p) if n.startswith("w") else p) for n, p in params.items()}
    ref = multi_head_attention_ref(rt(q), rt(k), rt(v), mask, params_r, NH)
    ref_nomask = multi_head_attention_ref(rt(q), rt(k), rt(v), None, params_r, NH)

    assert out.shape == (B, S, H)
    assert jnp.allclose(out, ref, rtol=2e-2, atol=2e-2), "mismatch vs reference (masked)"
    assert jnp.allclose(out_nomask, ref_nomask, rtol=2e-2, atol=2e-2), \
        "mismatch vs reference (no mask)"

    print("KERNEL_OK")
</pallas_src>

<mosaic_0001>
module attributes {stable_mosaic.version = 11 : i64} {
  func.func @_linear_kernel(%arg0: i32, %arg1: i32, %arg2: memref<1x8x32xbf16, #tpu.memory_space<vmem>>, %arg3: memref<32x32xbf16, #tpu.memory_space<vmem>>, %arg4: memref<1x32xf32, #tpu.memory_space<vmem>>, %arg5: memref<1x8x32xbf16, #tpu.memory_space<vmem>>) attributes {dimension_semantics = [#tpu.dimension_semantics<parallel>, #tpu.dimension_semantics<parallel>], iteration_bounds = array<i64: 2, 1>, scalar_prefetch = 0 : i64, scratch_operands = 0 : i64, tpu.core_type = #tpu.core_type<tc>, window_params = [{transform_indices = @transform_0, window_bounds = array<i64: 1, 8, 32>}, {pipeline_mode = #tpu.pipeline_mode<synchronous>, transform_indices = @transform_1, window_bounds = array<i64: 32, 32>}, {pipeline_mode = #tpu.pipeline_mode<synchronous>, transform_indices = @transform_2, window_bounds = array<i64: 1, 32>}, {transform_indices = @transform_3, window_bounds = array<i64: 1, 8, 32>}]} {
    %c0 = arith.constant 0 : index
    %c0_0 = arith.constant 0 : index
    %c0_1 = arith.constant 0 : index
    %0 = vector.load %arg2[%c0, %c0_0, %c0_1] : memref<1x8x32xbf16, #tpu.memory_space<vmem>>, vector<1x8x32xbf16>
    %1 = vector.shape_cast %0 : vector<1x8x32xbf16> to vector<8x32xbf16>
    %c0_2 = arith.constant 0 : index
    %c0_3 = arith.constant 0 : index
    %2 = vector.load %arg3[%c0_2, %c0_3] : memref<32x32xbf16, #tpu.memory_space<vmem>>, vector<32x32xbf16>
    %cst = arith.constant dense<0.000000e+00> : vector<8x32xf32>
    %3 = tpu.matmul %1, %2, %cst {dimension_numbers = #tpu.dot_dimension_numbers<[1], [0], [0], [1], [0, 0, 1, 1], [], []>} : vector<8x32xbf16>, vector<32x32xbf16>, vector<8x32xf32> -> vector<8x32xf32>
    %c0_4 = arith.constant 0 : index
    %c0_5 = arith.constant 0 : index
    %4 = vector.load %arg4[%c0_4, %c0_5] : memref<1x32xf32, #tpu.memory_space<vmem>>, vector<1x32xf32>
    %5 = vector.broadcast %4 : vector<1x32xf32> to vector<8x32xf32>
    %6 = arith.addf %3, %5 : vector<8x32xf32>
    %7 = arith.truncf %6 : vector<8x32xf32> to vector<8x32xbf16>
    %c0_6 = arith.constant 0 : index
    %c0_7 = arith.constant 0 : index
    %c0_8 = arith.constant 0 : index
    %8 = vector.load %arg5[%c0_6, %c0_7, %c0_8] : memref<1x8x32xbf16, #tpu.memory_space<vmem>>, vector<1x8x32xbf16>
    %9 = vector.shape_cast %8 : vector<1x8x32xbf16> to vector<8x32xbf16>
    %10 = vector.shape_cast %7 : vector<8x32xbf16> to vector<1x8x32xbf16>
    tpu.vector_store %arg5[%c0_6, %c0_7, %c0_8], %10 {strides = array<i32>} : memref<1x8x32xbf16, #tpu.memory_space<vmem>>, vector<1x8x32xbf16>,
    return
  }
  func.func @transform_0(%arg0: i32, %arg1: i32) -> (i32, i32, i32) {
    %c0_i32 = arith.constant 0 : i32
    %c0_i32_0 = arith.constant 0 : i32
    return %arg0, %arg1, %c0_i32 : i32, i32, i32
  }
  func.func @transform_1(%arg0: i32, %arg1: i32) -> (i32, i32) {
    %c0_i32 = arith.constant 0 : i32
    %c0_i32_0 = arith.constant 0 : i32
    %c0_i32_1 = arith.constant 0 : i32
    return %c0_i32, %c0_i32_0 : i32, i32
  }
  func.func @transform_2(%arg0: i32, %arg1: i32) -> (i32, i32) {
    %c0_i32 = arith.constant 0 : i32
    %c0_i32_0 = arith.constant 0 : i32
    %c0_i32_1 = arith.constant 0 : i32
    return %c0_i32, %c0_i32_0 : i32, i32
  }
  func.func @transform_3(%arg0: i32, %arg1: i32) -> (i32, i32, i32) {
    %c0_i32 = arith.constant 0 : i32
    %c0_i32_0 = arith.constant 0 : i32
    return %arg0, %arg1, %c0_i32 : i32, i32, i32
  }
}

</mosaic_0001>

<llo_original>
// kernel: tpu_custom_call.1
$region0: #{tpu_custom_call.1}
  #allocation0 [shape = 'u32[]', space=smem, size = 0x4, offset = 0x4, fixed_abs, tag = 'smem constant byte address 0x4 - core index']
  #allocation1 [shape = 'u32[72,128]{1,0:T(1,128)}', space=vmem, size = 0x9000, scoped, tag = 'internal scratch']
  %s0 = inlined_call_operand.hbm [shape: bf16[2,8,32], index: 0, kind: input, shape index: {}]
  %s1 = inlined_call_operand.hbm [shape: bf16[32,32], index: 1, kind: input, shape index: {}]
  %s2 = inlined_call_operand.vmem [shape: f32[1,32], index: 2, kind: input, shape index: {}]
  %s3 = inlined_call_operand.hbm [shape: bf16[2,8,32], index: 3, kind: output, shape index: {}]
  %s4 = sld [smem:[#allocation0]]
  $region53: #{tpu_custom_call.1} parent=0
    _
  %s6 = ssub.s32 1, %s4
  %s7 = scalar_select 0, %s6, %s4
  $region1: #{tpu_custom_call.1} parent=0
    #allocation2 [shape = 'u8[4096]{0}', space=vmem, size = 0x1000, scoped, tag = 'input window, operand 0']
    #allocation3 [shape = 's32[2]{0}', space=sflag, size = 0x8, scoped, tag = 'scoped memory for tpu_custom_call.1']
    #allocation4 [shape = 's32[2]{0}', space=sflag, size = 0x8, scoped, tag = 'scoped memory for tpu_custom_call.1']
    #allocation5 [shape = 'u8[8192]{0}', space=vmem, size = 0x2000, scoped, tag = 'input window, operand 1, single buffered']
    #allocation6 [shape = 's32[1]{0}', space=sflag, size = 0x4, scoped, tag = 'scoped memory for tpu_custom_call.1']
    #allocation7 [shape = 'u8[4096]{0}', space=vmem, size = 0x1000, scoped, tag = 'output window, operand 0']
    %8 = vsyncpa [#allocation3], 0
    %s9 = scalar_lea.sflag [#allocation3], 1
    %10 = vsyncpa %s9, 0
    %11 = vsyncpa [#allocation6], 0
    %12 = vsyncpa [#allocation4], 0
    %s13 = scalar_lea.sflag [#allocation4], 1
    %14 = vsyncpa %s13, 0
    loop: start=0, step=1, limit=4
    $region2: #{tpu_custom_call.1} parent=1 // loop_pre_header
      _
    $region3: #{tpu_custom_call.1} parent=1 // loop_header
      %s16 = sphi 0, %s20
      %p17 = scmp.ge.s32.totalorder %s16, 4
      %s23 = sphi 0, %s35
      %s24 = sphi 0, %s31
      %s25 = sphi 0, %s23
      %s26 = sphi 0, %s24
      %s27 = sphi 0, %s25
      %s28 = sphi 0, %s26
      %s40 = sphi 0, %s42
      %s43 = sphi 0, %s40
      %s44 = sphi 0, %s43
      %s60 = sphi 0, %s44
      %s64 = sphi 0, %s64
      %s66 = sphi 0, %s64
      %s67 = sphi 0, %s66
      %s81 = sphi 0, %s67
      %s85 = sphi 0, %s85
      %s87 = sphi 0, %s85
      %s88 = sphi 0, %s87
      %s102 = sphi 0, %s88
      %s110 = sphi 0, %s112
      %s113 = sphi 0, %s110
      %s114 = sphi 0, %s113
      %s130 = sphi 0, %s114
    $region4: #{tpu_custom_call.1} parent=1 // loop_header_branch
      %19 = sbr.rel (%p17) target = $region8
    $region5: #{tpu_custom_call.1} parent=1 // loop_body
      %s21 = ssub.s32 %s16, 1
      %s22 = ssub.s32 %s16, 2
      %s29 = sadd.s32 1, %s24
      %p30 = scmp.ge.s32.totalorder %s29, 1
      %s31 = scalar_select %p30, 0, %s29
      %s32 = sadd.s32 1, %s23
      %s33 = scalar_select %p30, %s32, %s23
      %p34 = scmp.ge.s32.totalorder %s33, 2
      %s35 = scalar_select %p34, 0, %s33
      %s36 = ssub.s32 %s23, %s35
      %s37 = ssub.s32 %s24, %s31
      %s38 = sor.u32 %s36, %s37
      %p39 = scmp.eq.s32.totalorder %s38, 0
      %s41 = sadd.s32 %s40, 1
      %s42 = scalar_select %p39, %s40, %s41
      %p45 = pneg %p39
      %p46 = scmp.eq.s32.totalorder %s16, 1
      %p47 = por %p45, %p46
      %p48 = scmp.ne.s32.totalorder %s40, %s43
      %p49 = scmp.eq.s32.totalorder %s16, 0
      %p50 = por %p48, %p49
      %p51 = scmp.ne.s32.totalorder %s40, %s43
      %p52 = scmp.eq.s32.totalorder %s21, 1
      %p53 = por %p51, %p52
      %p54 = scmp.ne.s32.totalorder %s43, %s44
      %p55 = scmp.eq.s32.totalorder %s21, 0
      %p56 = por %p54, %p55
      %p57 = scmp.ne.s32.totalorder %s43, %s44
      %p58 = scmp.eq.s32.totalorder %s22, 1
      %p59 = por %p57, %p58
      %p61 = scmp.ne.s32.totalorder %s44, %s60
      %p62 = scmp.eq.s32.totalorder %s22, 0
      %p63 = por %p61, %p62
      %s65 = sadd.s32 %s64, 1
      %p68 = scmp.eq.s32.totalorder %s16, 1
      %p69 = scmp.ne.s32.totalorder %s64, %s66
      %p70 = scmp.eq.s32.totalorder %s16, 0
      %p71 = por %p69, %p70
      %p72 = scmp.ne.s32.totalorder %s64, %s66
      %p73 = scmp.eq.s32.totalorder %s21, 1
      %p74 = por %p72, %p73
      %p75 = scmp.ne.s32.totalorder %s66, %s67
      %p76 = scmp.eq.s32.totalorder %s21, 0
      %p77 = por %p75, %p76
      %p78 = scmp.ne.s32.totalorder %s66, %s67
      %p79 = scmp.eq.s32.totalorder %s22, 1
      %p80 = por %p78, %p79
      %p82 = scmp.ne.s32.totalorder %s67, %s81
      %p83 = scmp.eq.s32.totalorder %s22, 0
      %p84 = por %p82, %p83
      %s86 = sadd.s32 %s85, 1
      %p89 = scmp.eq.s32.totalorder %s16, 1
      %p90 = scmp.ne.s32.totalorder %s85, %s87
      %p91 = scmp.eq.s32.totalorder %s16, 0
      %p92 = por %p90, %p91
      %p93 = scmp.ne.s32.totalorder %s85, %s87
      %p94 = scmp.eq.s32.totalorder %s21, 1
      %p95 = por %p93, %p94
      %p96 = scmp.ne.s32.totalorder %s87, %s88
      %p97 = scmp.eq.s32.totalorder %s21, 0
      %p98 = por %p96, %p97
      %p99 = scmp.ne.s32.totalorder %s87, %s88
      %p100 = scmp.eq.s32.totalorder %s22, 1
      %p101 = por %p99, %p100
      %p103 = scmp.ne.s32.totalorder %s88, %s102
      %p104 = scmp.eq.s32.totalorder %s22, 0
      %p105 = por %p103, %p104
      %s106 = ssub.s32 %s23, %s35
      %s107 = ssub.s32 %s24, %s31
      %s108 = sor.u32 %s106, %s107
      %p109 = scmp.eq.s32.totalorder %s108, 0
      %s111 = sadd.s32 %s110, 1
      %s112 = scalar_select %p109, %s110, %s111
      %p115 = pneg %p109
      %p116 = scmp.eq.s32.totalorder %s16, 1
      %p117 = por %p115, %p116
      %p118 = scmp.ne.s32.totalorder %s110, %s113
      %p119 = scmp.eq.s32.totalorder %s16, 0
      %p120 = por %p118, %p119
      %p121 = scmp.ne.s32.totalorder %s110, %s113
      %p122 = scmp.eq.s32.totalorder %s21, 1
      %p123 = por %p121, %p122
      %p124 = scmp.ne.s32.totalorder %s113, %s114
      %p125 = scmp.eq.s32.totalorder %s21, 0
      %p126 = por %p124, %p125
      %p127 = scmp.ne.s32.totalorder %s113, %s114
      %p128 = scmp.eq.s32.totalorder %s22, 1
      %p129 = por %p127, %p128
      %p131 = scmp.ne.s32.totalorder %s114, %s130
      %p132 = scmp.eq.s32.totalorder %s22, 0
      %p133 = por %p131, %p132
      %p134 = scmp.le.s32.totalorder 1, %s16
      %p135 = scmp.lt.s32.totalorder %s16, 3
      %p136 = pnand %p134, %p135
      %p137 = pneg %p136
      // Predicated region
      $region9: #{tpu_custom_call.1} parent=5 // pred_check
        _
      $region10: #{tpu_custom_call.1} parent=5 // pred_check_branch
        %139 = sbr.rel (%p136) target = $region12
      $region11: #{tpu_custom_call.1} parent=5 // pred_region
        %s140 = ssub.s32 %s16, 1
        // Predicated region
        $region13: #{tpu_custom_call.1} parent=11 // pred_check
          %p141 = pneg %p77
        $region14: #{tpu_custom_call.1} parent=11 // pred_check_branch
          %143 = sbr.rel (%p141) target = $region16
        $region15: #{tpu_custom_call.1} parent=11 // pred_region
          %145 = vsyncadd [#allocation6], 0
          %s146 = sshll.u32 %s1, 4
          %s147 = int_to_ptr.hbm [resolvable:$true] %s146
          %s148 = sshll.u32 [#allocation5], 4
          %s149 = int_to_ptr.vmem [resolvable:$true] %s148
          %154 = dma.hbm_to_vmem [thread:$0]  %s147, 256, %s149, [#allocation6], 64, 64, 4
        $region16: #{tpu_custom_call.1} parent=11 // pred_fallthru
          _
        // Predicated region
        $region17: #{tpu_custom_call.1} parent=11 // pred_check
          %p155 = pneg %p98
        $region18: #{tpu_custom_call.1} parent=11 // pred_check_branch
          %157 = sbr.rel (%p155) target = $region20
        $region19: #{tpu_custom_call.1} parent=11 // pred_region
          _
        $region20: #{tpu_custom_call.1} parent=11 // pred_fallthru
          _
      $region12: #{tpu_custom_call.1} parent=5 // pred_fallthru
        _
      %p158 = scmp.lt.s32.totalorder %s16, 2
      // Predicated region
      $region21: #{tpu_custom_call.1} parent=5 // pred_check
        %p159 = pneg %p158
      $region22: #{tpu_custom_call.1} parent=5 // pred_check_branch
        %161 = sbr.rel (%p159) target = $region24
      $region23: #{tpu_custom_call.1} parent=5 // pred_region
        // Predicated region
        $region25: #{tpu_custom_call.1} parent=23 // pred_check
          %p162 = pneg %p50
        $region26: #{tpu_custom_call.1} parent=23 // pred_check_branch
          %164 = sbr.rel (%p162) target = $region28
        $region27: #{tpu_custom_call.1} parent=23 // pred_region
          %s165 = sand.u32 %s40, 1
          %s166 = scalar_lea.sflag [#allocation3], %s165
          %s167 = sand.u32 %s40, 1
          %s168 = smul.addr %s167, 4
          %s169 = scalar_lea.vmem [#allocation2], %s168
          %171 = vsyncadd %s166, 0
          %s172 = sadd.s32 %s24, %s23
          %s173 = smul.addr %s172, 4
          %s174 = scalar_lea.hbm %s0, %s173
          %s176 = sshll.u32 %s174, 4
          %s177 = int_to_ptr.hbm [resolvable:$true] %s176
          %s178 = sshll.u32 %s169, 4
          %s179 = int_to_ptr.vmem [resolvable:$true] %s178
          %181 = dma.hbm_to_vmem [thread:$0]  %s177, 64, %s179, %s166
        $region28: #{tpu_custom_call.1} parent=23 // pred_fallthru
          _
      $region24: #{tpu_custom_call.1} parent=5 // pred_fallthru
        _
      %p182 = scmp.le.s32.totalorder 1, %s16
      %p183 = scmp.lt.s32.totalorder %s16, 3
      %p184 = pnand %p182, %p183
      %p185 = pneg %p184
      // Predicated region
      $region29: #{tpu_custom_call.1} parent=5 // pred_check
        _
      $region30: #{tpu_custom_call.1} parent=5 // pred_check_branch
        %187 = sbr.rel (%p184) target = $region32
      $region31: #{tpu_custom_call.1} parent=5 // pred_region
        %s188 = ssub.s32 %s16, 1
        %s189 = sand.u32 %s43, 1
        %s190 = scalar_lea.sflag [#allocation3], %s189
        %s191 = sand.u32 %s43, 1
        %s192 = smul.addr %s191, 4
        %s193 = scalar_lea.vmem [#allocation2], %s192
        // Predicated region
        $region33: #{tpu_custom_call.1} parent=31 // pred_check
          %p194 = pneg %p56
        $region34: #{tpu_custom_call.1} parent=31 // pred_check_branch
          %196 = sbr.rel (%p194) target = $region36
        $region35: #{tpu_custom_call.1} parent=31 // pred_region
          %198 = dma.done %s190, 64
        $region36: #{tpu_custom_call.1} parent=31 // pred_fallthru
          _
        // Predicated region
        $region37: #{tpu_custom_call.1} parent=31 // pred_check
          %p199 = pneg %p77
        $region38: #{tpu_custom_call.1} parent=31 // pred_check_branch
          %201 = sbr.rel (%p199) target = $region40
        $region39: #{tpu_custom_call.1} parent=31 // pred_region
          %203 = dma.done [#allocation6], 256
        $region40: #{tpu_custom_call.1} parent=31 // pred_fallthru
          _
        %s204 = sand.u32 %s43, 1
        %s205 = scalar_lea.sflag [#allocation3], %s204
        %s206 = sand.u32 %s43, 1
        %s207 = smul.addr %s206, 4
        %s208 = scalar_lea.vmem [#allocation2], %s207
        %p209 = pneg %p56
        %p210 = pneg %p53
        %p211 = pneg %p77
        %p212 = pneg %p74
        %p213 = pneg %p98
        %p214 = pneg %p95
        %p215 = pneg %p126
        %p216 = pneg %p123
        %s217 = sand.u32 %s113, 1
        %s218 = scalar_lea.sflag [#allocation4], %s217
        %s219 = sand.u32 %s113, 1
        %s220 = smul.addr %s219, 4
        %s221 = scalar_lea.vmem [#allocation7], %s220
        %v223 = vld [vmem:[%s193] sm:$0xf]
        %v224 = vld [vmem:[#allocation5] sm:$0xf]
        %v225 = vld [vmem:[#allocation5 + $0x4] sm:$0xf]
        %v226 = vld [vmem:[#allocation5 + $0x8] sm:$0xf]
        %v227 = vld [vmem:[#allocation5 + $0xc] sm:$0xf]
        %v228 = vld [vmem:[%s2] sm:$0x1]
        %v230 = vperm.slane %v228, 0
        %v236 = vunpack.c.l.b16 %v224
        %v237 = vunpack.c.l.b16 %v225
        %v238 = vunpack.c.l.b16 %v226
        %v239 = vunpack.c.l.b16 %v227
        %v240 = vpack.c.b16 %v237, %v236
        %v241 = vpack.c.b16 %v239, %v238
        %vm244 = vcmask 261120
        %v246 = vsel %vm244, %v223, 0
        %248 = vmatpush.bf16.msra.mxu0 0
        %249 = vmatpush.bf16.msra.mxu0 0
        %250 = vmatpush.bf16.msra.mxu0 0
        %251 = vmatpush.bf16.msra.mxu0 0
        %252 = vmatpush.bf16.msra.mxu0 0
        %253 = vmatpush.bf16.msra.mxu0 0
        %254 = vmatpush.bf16.msra.mxu0 %v241
        %255 = vmatpush.bf16.msra.mxu0 %v240
        %256 = vmatmul.bf16.gmra.mxu0 %v246
        %v257 = vpop.f32.mrf.mxu0
        %v258 = vadd.f32 %v230, %v257
        %v259 = vpop.f32.mrf.mxu0
        %260 = vdwg.mxu0
        %v261 = vpack.c.bf16 %v258, %v258
        %vm262 = vcmask 257024
        %263 = vst.msk [vmem:[%s221] sm:$0xf] %vm262, %v261
        %s264 = sand.u32 %s113, 1
        %s265 = scalar_lea.sflag [#allocation4], %s264
        %s266 = sand.u32 %s113, 1
        %s267 = smul.addr %s266, 4
        %s268 = scalar_lea.vmem [#allocation7], %s267
        // Predicated region
        $region41: #{tpu_custom_call.1} parent=31 // pred_check
          %p269 = pneg %p123
        $region42: #{tpu_custom_call.1} parent=31 // pred_check_branch
          %271 = sbr.rel (%p269) target = $region44
        $region43: #{tpu_custom_call.1} parent=31 // pred_region
          %273 = vsyncadd %s265, 0
          %s274 = sadd.s32 %s26, %s25
          %s275 = smul.addr %s274, 4
          %s276 = scalar_lea.hbm %s3, %s275
          %s278 = sshll.u32 %s268, 4
          %s279 = int_to_ptr.vmem [resolvable:$true] %s278
          %s280 = sshll.u32 %s276, 4
          %s281 = int_to_ptr.hbm [resolvable:$true] %s280
          %283 = dma.vmem_to_hbm [thread:$0]  %s279, 64, %s281, %s265
        $region44: #{tpu_custom_call.1} parent=31 // pred_fallthru
          _
      $region32: #{tpu_custom_call.1} parent=5 // pred_fallthru
        _
      %p284 = scmp.le.s32.totalorder 2, %s16
      // Predicated region
      $region45: #{tpu_custom_call.1} parent=5 // pred_check
        %p285 = pneg %p284
      $region46: #{tpu_custom_call.1} parent=5 // pred_check_branch
        %287 = sbr.rel (%p285) target = $region48
      $region47: #{tpu_custom_call.1} parent=5 // pred_region
        %s288 = ssub.s32 %s16, 2
        // Predicated region
        $region49: #{tpu_custom_call.1} parent=47 // pred_check
          %p289 = pneg %p129
        $region50: #{tpu_custom_call.1} parent=47 // pred_check_branch
          %291 = sbr.rel (%p289) target = $region52
        $region51: #{tpu_custom_call.1} parent=47 // pred_region
          %s292 = sand.u32 %s114, 1
          %s293 = scalar_lea.sflag [#allocation4], %s292
          %s294 = sand.u32 %s114, 1
          %s295 = smul.addr %s294, 4
          %s296 = scalar_lea.vmem [#allocation7], %s295
          %298 = dma.done %s293, 64
        $region52: #{tpu_custom_call.1} parent=47 // pred_fallthru
          _
      $region48: #{tpu_custom_call.1} parent=5 // pred_fallthru
        _
    $region6: #{tpu_custom_call.1} parent=1 // loop_footer
      %s20 = sadd.s32 1, %s16
    $region7: #{tpu_custom_call.1} parent=1 // loop_footer_branch
      %15 = sbr.rel target = $region3
    $region8: #{tpu_custom_call.1} parent=1 // loop_exit
      _
    %299 = vsyncpa [#allocation3], 1
    %s300 = scalar_lea.sflag [#allocation3], 1
    %301 = vsyncpa %s300, 1
    %302 = vsyncpa [#allocation6], 1
    %303 = vsyncpa [#allocation4], 1
    %s304 = scalar_lea.sflag [#allocation4], 1
    %305 = vsyncpa %s304, 1

</llo_original>
